<compile_context>
chip_gen: v7x
topology: tpu7x:2x2x1
jax: 0.10.0
libtpu: 0.0.40
codegen_flags: <defaults>
</compile_context>

<pallas_src>
import jax
import jax.numpy as jnp
from jax import lax
from jax.experimental import pallas as pl
from jax.experimental.pallas import tpu as pltpu


def _round_up(x, m):
    return ((x + m - 1) // m) * m


def decoder_kernel(x_ref, w_ref, a_ref, out_ref):
    """One (batch-element, output-tile) grid step.

    x_ref   : (1, Cin_p, Lp)       bf16  q+sp (+ ones bias channel), lane-padded
    w_ref   : (3, Cout_p, Cin_p)   bf16  per-tap conv weights (bias in tap 1)
    a_ref   : (3, Lp, TILE)        bf16  0/1 shift(+/-1) x nearest-upsample mats
    out_ref : (1, Cout_p, TILE)    f32
    """
    f32 = jnp.float32
    bf16 = jnp.bfloat16
    x = x_ref[0]                                                   # (Cin_p, Lp)

    # Weights first (Cout < Cin): per-tap channel mixing, f32 accumulation.
    u0 = jnp.dot(w_ref[0], x, preferred_element_type=f32).astype(bf16)
    u1 = jnp.dot(w_ref[1], x, preferred_element_type=f32).astype(bf16)
    u2 = jnp.dot(w_ref[2], x, preferred_element_type=f32).astype(bf16)

    # Fused tap-shift + nearest upsample; the k-sum accumulates in f32.
    out = jnp.dot(u0, a_ref[0], preferred_element_type=f32)
    out += jnp.dot(u1, a_ref[1], preferred_element_type=f32)
    out += jnp.dot(u2, a_ref[2], preferred_element_type=f32)
    out_ref[0] = out


def make_decoder_constants(weight, bias, L, out_size):
    """Constants depend only on module params and (L, out_size): build once,
    outside the per-call path (hoisted per review)."""
    Cout, Cin, K = weight.shape                    # (channel, 2*channel, 3)
    assert K == 3
    Lout = out_size

    Cin_p = _round_up(Cin + 1, 8)                  # +1 = ones channel carrying bias
    Cout_p = _round_up(Cout, 8)
    Lp = _round_up(L, 128)                         # lane-dense activations
    tile = 512                                     # v7x-safe VMEM budget per step
    Loutp = _round_up(Lout, 128)
    if Loutp > tile:
        Loutp = _round_up(Loutp, tile)
    else:
        tile = Loutp

    # Per-tap weights, zero-padded; bias folded into the centre tap via the
    # extra all-ones input channel (each output position sees that tap once).
    w_taps = jnp.zeros((3, Cout_p, Cin_p), jnp.float32)
    w_taps = w_taps.at[:, :Cout, :Cin].set(jnp.transpose(weight, (2, 0, 1)))
    w_taps = w_taps.at[1, :Cout, Cin].set(bias)
    w_taps = w_taps.astype(jnp.bfloat16)

    # Batch-shared fused shift(+/-1) x nearest-upsample 0/1 matrices,
    # (L, Lout) padded to (Lp, Loutp); 0/1 is exact in bf16.
    src = (jnp.arange(Lout, dtype=jnp.int32) * L) // Lout           # PyTorch nearest
    src_p = jnp.full((Loutp,), -4, jnp.int32).at[:Lout].set(src)    # padding -> no tap
    l = jnp.arange(Lp, dtype=jnp.int32)[:, None]
    taps = []
    for k in range(3):
        tgt = (src_p + (k - 1))[None, :]
        taps.append((l == tgt) & (tgt >= 0) & (tgt < L))
    a_mats = jnp.stack(taps).astype(jnp.bfloat16)                   # (3, Lp, Loutp)

    dims = dict(Cin=Cin, Cout=Cout, Cin_p=Cin_p, Cout_p=Cout_p,
                L=L, Lp=Lp, Lout=Lout, Loutp=Loutp, tile=tile)
    return w_taps, a_mats, dims


def decoder_forward(q_after, sp_embed, std_embed, consts):
    """q_after / sp_embed: lists of (N, 2*channel, L) arrays (NCL layout)."""
    del std_embed                                   # unused by the PyTorch forward
    w_taps, a_mats, d = consts
    q = q_after[::-1][0]
    sp = sp_embed[::-1][0]
    N, Cin, L = q.shape
    assert Cin == d["Cin"] and L == d["L"]
    Cin_p, Cout_p = d["Cin_p"], d["Cout_p"]
    Lp, Loutp, tile = d["Lp"], d["Loutp"], d["tile"]
    n_tiles = Loutp // tile

    # Lane-dense, bias-augmented activation slab (wrapper-side layout work).
    x = (q + sp).astype(jnp.float32)                                # (N, Cin, L)
    x_slab = jnp.zeros((N, Cin_p, Lp), jnp.float32)
    x_slab = x_slab.at[:, :Cin, :L].set(x)
    x_slab = x_slab.at[:, Cin, :L].set(1.0)                         # bias channel
    x_slab = x_slab.astype(jnp.bfloat16)

    out_p = pl.pallas_call(
        decoder_kernel,
        out_shape=jax.ShapeDtypeStruct((N, Cout_p, Loutp), jnp.float32),
        grid_spec=pltpu.PrefetchScalarGridSpec(
            num_scalar_prefetch=0,
            grid=(N, n_tiles),
            in_specs=[
                pl.BlockSpec((1, Cin_p, Lp), lambda n, j: (n, 0, 0)),
                pl.BlockSpec((3, Cout_p, Cin_p), lambda n, j: (0, 0, 0)),
                pl.BlockSpec((3, Lp, tile), lambda n, j: (0, 0, j)),
            ],
            out_specs=pl.BlockSpec((1, Cout_p, tile), lambda n, j: (n, 0, j)),
        ),
        compiler_params=pltpu.CompilerParams(
            dimension_semantics=("parallel", "parallel")),
    )(x_slab, w_taps, a_mats)

    # Strip channel / length padding -> PyTorch layout (N, Cout, Lout).
    return out_p[:, :d["Cout"], :d["Lout"]]


def reference(x, weight, bias, out_size):
    """Pure-JAX reference: Conv1d(pad=1) + bias + nearest Upsample."""
    y = lax.conv_general_dilated(
        x, weight, window_strides=(1,), padding=((1, 1),),
        dimension_numbers=("NCH", "OIH", "NCH"))
    y = y + bias[None, :, None]
    L = x.shape[-1]
    src = (jnp.arange(out_size, dtype=jnp.int32) * L) // out_size
    return y[:, :, src]


if __name__ == "__main__":
    # Decoder(in_channel=16, channel=4): Conv1d(8 -> 4, k=3, pad=1), Upsample(16)
    in_channel = 16      # target length after Upsample
    channel = 4
    N, Cin, L = 2, channel * 2, 8

    key = jax.random.PRNGKey(0)
    k_w, k_b, k_q0, k_q1, k_s0, k_s1, k_std = jax.random.split(key, 7)

    # Deterministic parameter init (Conv1d uniform-style fan-in scaling).
    fan_in = Cin * 3
    bound = 1.0 / (fan_in ** 0.5)
    weight = jax.random.uniform(k_w, (channel, Cin, 3), jnp.float32, -bound, bound)
    bias = jax.random.uniform(k_b, (channel,), jnp.float32, -bound, bound)

    # Lists of feature maps (only the last of each list is consumed).
    q_after = [jax.random.normal(k_q0, (N, Cin, L), jnp.float32),
               jax.random.normal(k_q1, (N, Cin, L), jnp.float32)]
    sp_embed = [jax.random.normal(k_s0, (N, Cin, L), jnp.float32),
                jax.random.normal(k_s1, (N, Cin, L), jnp.float32)]
    std_embed = jax.random.normal(k_std, (N, Cin, L), jnp.float32)  # unused

    consts = make_decoder_constants(weight, bias, L, in_channel)
    out = decoder_forward(q_after, sp_embed, std_embed, consts)
    out = jax.block_until_ready(out)

    # Reference in f32 on the same bf16-rounded operands the kernel consumes.
    bf = lambda a: a.astype(jnp.bfloat16).astype(jnp.float32)
    x_ref_in = bf(q_after[-1] + sp_embed[-1])
    ref = reference(x_ref_in, bf(weight), bf(bias), in_channel)

    assert out.shape == (N, channel, in_channel), out.shape
    max_err = float(jnp.max(jnp.abs(out - ref)))
    assert max_err < 3e-2, max_err

    print("KERNEL_OK")
</pallas_src>

<mosaic_0001>
module attributes {stable_mosaic.version = 11 : i64} {
  func.func @decoder_kernel(%arg0: i32, %arg1: i32, %arg2: memref<1x16x128xbf16, #tpu.memory_space<vmem>>, %arg3: memref<3x8x16xbf16, #tpu.memory_space<vmem>>, %arg4: memref<3x128x128xbf16, #tpu.memory_space<vmem>>, %arg5: memref<1x8x128xf32, #tpu.memory_space<vmem>>) attributes {dimension_semantics = [#tpu.dimension_semantics<parallel>, #tpu.dimension_semantics<parallel>], iteration_bounds = array<i64: 2, 1>, scalar_prefetch = 0 : i64, scratch_operands = 0 : i64, tpu.core_type = #tpu.core_type<tc>, window_params = [{transform_indices = @transform_0, window_bounds = array<i64: 1, 16, 128>}, {pipeline_mode = #tpu.pipeline_mode<synchronous>, transform_indices = @transform_1, window_bounds = array<i64: 3, 8, 16>}, {transform_indices = @transform_2, window_bounds = array<i64: 3, 128, 128>}, {transform_indices = @transform_3, window_bounds = array<i64: 1, 8, 128>}]} {
    %c0 = arith.constant 0 : index
    %c0_0 = arith.constant 0 : index
    %c0_1 = arith.constant 0 : index
    %0 = vector.load %arg2[%c0, %c0_0, %c0_1] : memref<1x16x128xbf16, #tpu.memory_space<vmem>>, vector<1x16x128xbf16>
    %1 = vector.shape_cast %0 : vector<1x16x128xbf16> to vector<16x128xbf16>
    %c0_2 = arith.constant 0 : index
    %c0_3 = arith.constant 0 : index
    %c0_4 = arith.constant 0 : index
    %2 = vector.load %arg3[%c0_2, %c0_3, %c0_4] : memref<3x8x16xbf16, #tpu.memory_space<vmem>>, vector<1x8x16xbf16>
    %3 = vector.shape_cast %2 : vector<1x8x16xbf16> to vector<8x16xbf16>
    %cst = arith.constant dense<0.000000e+00> : vector<8x128xf32>
    %4 = tpu.matmul %3, %1, %cst {dimension_numbers = #tpu.dot_dimension_numbers<[1], [0], [0], [1], [0, 0, 1, 1], [], []>} : vector<8x16xbf16>, vector<16x128xbf16>, vector<8x128xf32> -> vector<8x128xf32>
    %5 = arith.truncf %4 : vector<8x128xf32> to vector<8x128xbf16>
    %c1 = arith.constant 1 : index
    %c0_5 = arith.constant 0 : index
    %c0_6 = arith.constant 0 : index
    %6 = vector.load %arg3[%c1, %c0_5, %c0_6] : memref<3x8x16xbf16, #tpu.memory_space<vmem>>, vector<1x8x16xbf16>
    %7 = vector.shape_cast %6 : vector<1x8x16xbf16> to vector<8x16xbf16>
    %cst_7 = arith.constant dense<0.000000e+00> : vector<8x128xf32>
    %8 = tpu.matmul %7, %1, %cst_7 {dimension_numbers = #tpu.dot_dimension_numbers<[1], [0], [0], [1], [0, 0, 1, 1], [], []>} : vector<8x16xbf16>, vector<16x128xbf16>, vector<8x128xf32> -> vector<8x128xf32>
    %9 = arith.truncf %8 : vector<8x128xf32> to vector<8x128xbf16>
    %c2 = arith.constant 2 : index
    %c0_8 = arith.constant 0 : index
    %c0_9 = arith.constant 0 : index
    %10 = vector.load %arg3[%c2, %c0_8, %c0_9] : memref<3x8x16xbf16, #tpu.memory_space<vmem>>, vector<1x8x16xbf16>
    %11 = vector.shape_cast %10 : vector<1x8x16xbf16> to vector<8x16xbf16>
    %cst_10 = arith.constant dense<0.000000e+00> : vector<8x128xf32>
    %12 = tpu.matmul %11, %1, %cst_10 {dimension_numbers = #tpu.dot_dimension_numbers<[1], [0], [0], [1], [0, 0, 1, 1], [], []>} : vector<8x16xbf16>, vector<16x128xbf16>, vector<8x128xf32> -> vector<8x128xf32>
    %13 = arith.truncf %12 : vector<8x128xf32> to vector<8x128xbf16>
    %c0_11 = arith.constant 0 : index
    %c0_12 = arith.constant 0 : index
    %c0_13 = arith.constant 0 : index
    %14 = vector.load %arg4[%c0_11, %c0_12, %c0_13] : memref<3x128x128xbf16, #tpu.memory_space<vmem>>, vector<1x128x128xbf16>
    %15 = vector.shape_cast %14 : vector<1x128x128xbf16> to vector<128x128xbf16>
    %cst_14 = arith.constant dense<0.000000e+00> : vector<8x128xf32>
    %16 = tpu.matmul %5, %15, %cst_14 {dimension_numbers = #tpu.dot_dimension_numbers<[1], [0], [0], [1], [0, 0, 1, 1], [], []>} : vector<8x128xbf16>, vector<128x128xbf16>, vector<8x128xf32> -> vector<8x128xf32>
    %c1_15 = arith.constant 1 : index
    %c0_16 = arith.constant 0 : index
    %c0_17 = arith.constant 0 : index
    %17 = vector.load %arg4[%c1_15, %c0_16, %c0_17] : memref<3x128x128xbf16, #tpu.memory_space<vmem>>, vector<1x128x128xbf16>
    %18 = vector.shape_cast %17 : vector<1x128x128xbf16> to vector<128x128xbf16>
    %cst_18 = arith.constant dense<0.000000e+00> : vector<8x128xf32>
    %19 = tpu.matmul %9, %18, %cst_18 {dimension_numbers = #tpu.dot_dimension_numbers<[1], [0], [0], [1], [0, 0, 1, 1], [], []>} : vector<8x128xbf16>, vector<128x128xbf16>, vector<8x128xf32> -> vector<8x128xf32>
    %20 = arith.addf %16, %19 : vector<8x128xf32>
    %c2_19 = arith.constant 2 : index
    %c0_20 = arith.constant 0 : index
    %c0_21 = arith.constant 0 : index
    %21 = vector.load %arg4[%c2_19, %c0_20, %c0_21] : memref<3x128x128xbf16, #tpu.memory_space<vmem>>, vector<1x128x128xbf16>
    %22 = vector.shape_cast %21 : vector<1x128x128xbf16> to vector<128x128xbf16>
    %cst_22 = arith.constant dense<0.000000e+00> : vector<8x128xf32>
    %23 = tpu.matmul %13, %22, %cst_22 {dimension_numbers = #tpu.dot_dimension_numbers<[1], [0], [0], [1], [0, 0, 1, 1], [], []>} : vector<8x128xbf16>, vector<128x128xbf16>, vector<8x128xf32> -> vector<8x128xf32>
    %24 = arith.addf %20, %23 : vector<8x128xf32>
    %c0_23 = arith.constant 0 : index
    %c0_24 = arith.constant 0 : index
    %c0_25 = arith.constant 0 : index
    %25 = vector.load %arg5[%c0_23, %c0_24, %c0_25] : memref<1x8x128xf32, #tpu.memory_space<vmem>>, vector<1x8x128xf32>
    %26 = vector.shape_cast %25 : vector<1x8x128xf32> to vector<8x128xf32>
    %27 = vector.shape_cast %24 : vector<8x128xf32> to vector<1x8x128xf32>
    tpu.vector_store %arg5[%c0_23, %c0_24, %c0_25], %27 {strides = array<i32>} : memref<1x8x128xf32, #tpu.memory_space<vmem>>, vector<1x8x128xf32>,
    return
  }
  func.func @transform_0(%arg0: i32, %arg1: i32) -> (i32, i32, i32) {
    %c0_i32 = arith.constant 0 : i32
    %c0_i32_0 = arith.constant 0 : i32
    %c0_i32_1 = arith.constant 0 : i32
    return %arg0, %c0_i32, %c0_i32_0 : i32, i32, i32
  }
  func.func @transform_1(%arg0: i32, %arg1: i32) -> (i32, i32, i32) {
    %c0_i32 = arith.constant 0 : i32
    %c0_i32_0 = arith.constant 0 : i32
    %c0_i32_1 = arith.constant 0 : i32
    %c0_i32_2 = arith.constant 0 : i32
    return %c0_i32, %c0_i32_0, %c0_i32_1 : i32, i32, i32
  }
  func.func @transform_2(%arg0: i32, %arg1: i32) -> (i32, i32, i32) {
    %c0_i32 = arith.constant 0 : i32
    %c0_i32_0 = arith.constant 0 : i32
    %c0_i32_1 = arith.constant 0 : i32
    return %c0_i32, %c0_i32_0, %arg1 : i32, i32, i32
  }
  func.func @transform_3(%arg0: i32, %arg1: i32) -> (i32, i32, i32) {
    %c0_i32 = arith.constant 0 : i32
    %c0_i32_0 = arith.constant 0 : i32
    return %arg0, %c0_i32, %arg1 : i32, i32, i32
  }
}

</mosaic_0001>

<llo_original>
// kernel: tpu_custom_call.1
$region0: #{tpu_custom_call.1}
  #allocation0 [shape = 'u32[]', space=smem, size = 0x4, offset = 0x4, fixed_abs, tag = 'smem constant byte address 0x4 - core index']
  #allocation1 [shape = 'u32[144,128]{1,0:T(1,128)}', space=vmem, size = 0x12000, scoped, tag = 'internal scratch']
  %s0 = inlined_call_operand.hbm [shape: bf16[2,16,128], index: 0, kind: input, shape index: {}]
  %s1 = inlined_call_operand.hbm [shape: bf16[3,8,16], index: 1, kind: input, shape index: {}]
  %s2 = inlined_call_operand.hbm [shape: bf16[3,128,128], index: 2, kind: input, shape index: {}]
  %s3 = inlined_call_operand.hbm [shape: f32[2,8,128], index: 3, kind: output, shape index: {}]
  %s4 = sld [smem:[#allocation0]]
  $region57: #{tpu_custom_call.1} parent=0
    _
  %s6 = ssub.s32 1, %s4
  %s7 = scalar_select 0, %s6, %s4
  $region1: #{tpu_custom_call.1} parent=0
    #allocation2 [shape = 'u8[8192]{0}', space=vmem, size = 0x2000, scoped, tag = 'input window, operand 0']
    #allocation3 [shape = 's32[2]{0}', space=sflag, size = 0x8, scoped, tag = 'scoped memory for tpu_custom_call.1']
    #allocation4 [shape = 's32[2]{0}', space=sflag, size = 0x8, scoped, tag = 'scoped memory for tpu_custom_call.1']
    #allocation5 [shape = 'u8[6144]{0}', space=vmem, size = 0x1800, scoped, tag = 'input window, operand 1, single buffered']
    #allocation6 [shape = 's32[1]{0}', space=sflag, size = 0x4, scoped, tag = 'scoped memory for tpu_custom_call.1']
    #allocation7 [shape = 'u8[98304]{0}', space=vmem, size = 0x18000, scoped, tag = 'input window, operand 2, single buffered']
    #allocation8 [shape = 'u8[8192]{0}', space=vmem, size = 0x2000, scoped, tag = 'output window, operand 0']
    %8 = vsyncpa [#allocation3], 0
    %s9 = scalar_lea.sflag [#allocation3], 1
    %10 = vsyncpa %s9, 0
    %11 = vsyncpa [#allocation6], 0
    %12 = vsyncpa [#allocation4], 0
    %s13 = scalar_lea.sflag [#allocation4], 1
    %14 = vsyncpa %s13, 0
    loop: start=0, step=1, limit=4
    $region2: #{tpu_custom_call.1} parent=1 // loop_pre_header
      _
    $region3: #{tpu_custom_call.1} parent=1 // loop_header
      %s16 = sphi 0, %s20
      %p17 = scmp.ge.s32.totalorder %s16, 4
      %s23 = sphi 0, %s35
      %s24 = sphi 0, %s31
      %s25 = sphi 0, %s23
      %s26 = sphi 0, %s24
      %s27 = sphi 0, %s25
      %s28 = sphi 0, %s26
      %s38 = sphi 0, %s40
      %s41 = sphi 0, %s38
      %s42 = sphi 0, %s41
      %s58 = sphi 0, %s42
      %s62 = sphi 0, %s62
      %s64 = sphi 0, %s62
      %s65 = sphi 0, %s64
      %s79 = sphi 0, %s65
      %s85 = sphi 0, %s87
      %s88 = sphi 0, %s85
      %s89 = sphi 0, %s88
      %s105 = sphi 0, %s89
      %s113 = sphi 0, %s115
      %s116 = sphi 0, %s113
      %s117 = sphi 0, %s116
      %s133 = sphi 0, %s117
    $region4: #{tpu_custom_call.1} parent=1 // loop_header_branch
      %19 = sbr.rel (%p17) target = $region8
    $region5: #{tpu_custom_call.1} parent=1 // loop_body
      %s21 = ssub.s32 %s16, 1
      %s22 = ssub.s32 %s16, 2
      %s29 = sadd.s32 1, %s24
      %p30 = scmp.ge.s32.totalorder %s29, 1
      %s31 = scalar_select %p30, 0, %s29
      %s32 = sadd.s32 1, %s23
      %s33 = scalar_select %p30, %s32, %s23
      %p34 = scmp.ge.s32.totalorder %s33, 2
      %s35 = scalar_select %p34, 0, %s33
      %s36 = ssub.s32 %s23, %s35
      %p37 = scmp.eq.s32.totalorder %s36, 0
      %s39 = sadd.s32 %s38, 1
      %s40 = scalar_select %p37, %s38, %s39
      %p43 = pneg %p37
      %p44 = scmp.eq.s32.totalorder %s16, 1
      %p45 = por %p43, %p44
      %p46 = scmp.ne.s32.totalorder %s38, %s41
      %p47 = scmp.eq.s32.totalorder %s16, 0
      %p48 = por %p46, %p47
      %p49 = scmp.ne.s32.totalorder %s38, %s41
      %p50 = scmp.eq.s32.totalorder %s21, 1
      %p51 = por %p49, %p50
      %p52 = scmp.ne.s32.totalorder %s41, %s42
      %p53 = scmp.eq.s32.totalorder %s21, 0
      %p54 = por %p52, %p53
      %p55 = scmp.ne.s32.totalorder %s41, %s42
      %p56 = scmp.eq.s32.totalorder %s22, 1
      %p57 = por %p55, %p56
      %p59 = scmp.ne.s32.totalorder %s42, %s58
      %p60 = scmp.eq.s32.totalorder %s22, 0
      %p61 = por %p59, %p60
      %s63 = sadd.s32 %s62, 1
      %p66 = scmp.eq.s32.totalorder %s16, 1
      %p67 = scmp.ne.s32.totalorder %s62, %s64
      %p68 = scmp.eq.s32.totalorder %s16, 0
      %p69 = por %p67, %p68
      %p70 = scmp.ne.s32.totalorder %s62, %s64
      %p71 = scmp.eq.s32.totalorder %s21, 1
      %p72 = por %p70, %p71
      %p73 = scmp.ne.s32.totalorder %s64, %s65
      %p74 = scmp.eq.s32.totalorder %s21, 0
      %p75 = por %p73, %p74
      %p76 = scmp.ne.s32.totalorder %s64, %s65
      %p77 = scmp.eq.s32.totalorder %s22, 1
      %p78 = por %p76, %p77
      %p80 = scmp.ne.s32.totalorder %s65, %s79
      %p81 = scmp.eq.s32.totalorder %s22, 0
      %p82 = por %p80, %p81
      %s83 = ssub.s32 %s24, %s31
      %p84 = scmp.eq.s32.totalorder %s83, 0
      %s86 = sadd.s32 %s85, 1
      %s87 = scalar_select %p84, %s85, %s86
      %p90 = pneg %p84
      %p91 = scmp.eq.s32.totalorder %s16, 1
      %p92 = por %p90, %p91
      %p93 = scmp.ne.s32.totalorder %s85, %s88
      %p94 = scmp.eq.s32.totalorder %s16, 0
      %p95 = por %p93, %p94
      %p96 = scmp.ne.s32.totalorder %s85, %s88
      %p97 = scmp.eq.s32.totalorder %s21, 1
      %p98 = por %p96, %p97
      %p99 = scmp.ne.s32.totalorder %s88, %s89
      %p100 = scmp.eq.s32.totalorder %s21, 0
      %p101 = por %p99, %p100
      %p102 = scmp.ne.s32.totalorder %s88, %s89
      %p103 = scmp.eq.s32.totalorder %s22, 1
      %p104 = por %p102, %p103
      %p106 = scmp.ne.s32.totalorder %s89, %s105
      %p107 = scmp.eq.s32.totalorder %s22, 0
      %p108 = por %p106, %p107
      %s109 = ssub.s32 %s23, %s35
      %s110 = ssub.s32 %s24, %s31
      %s111 = sor.u32 %s109, %s110
      %p112 = scmp.eq.s32.totalorder %s111, 0
      %s114 = sadd.s32 %s113, 1
      %s115 = scalar_select %p112, %s113, %s114
      %p118 = pneg %p112
      %p119 = scmp.eq.s32.totalorder %s16, 1
      %p120 = por %p118, %p119
      %p121 = scmp.ne.s32.totalorder %s113, %s116
      %p122 = scmp.eq.s32.totalorder %s16, 0
      %p123 = por %p121, %p122
      %p124 = scmp.ne.s32.totalorder %s113, %s116
      %p125 = scmp.eq.s32.totalorder %s21, 1
      %p126 = por %p124, %p125
      %p127 = scmp.ne.s32.totalorder %s116, %s117
      %p128 = scmp.eq.s32.totalorder %s21, 0
      %p129 = por %p127, %p128
      %p130 = scmp.ne.s32.totalorder %s116, %s117
      %p131 = scmp.eq.s32.totalorder %s22, 1
      %p132 = por %p130, %p131
      %p134 = scmp.ne.s32.totalorder %s117, %s133
      %p135 = scmp.eq.s32.totalorder %s22, 0
      %p136 = por %p134, %p135
      %p137 = scmp.le.s32.totalorder 1, %s16
      %p138 = scmp.lt.s32.totalorder %s16, 3
      %p139 = pnand %p137, %p138
      %p140 = pneg %p139
      // Predicated region
      $region9: #{tpu_custom_call.1} parent=5 // pred_check
        _
      $region10: #{tpu_custom_call.1} parent=5 // pred_check_branch
        %142 = sbr.rel (%p139) target = $region12
      $region11: #{tpu_custom_call.1} parent=5 // pred_region
        %s143 = ssub.s32 %s16, 1
        // Predicated region
        $region13: #{tpu_custom_call.1} parent=11 // pred_check
          %p144 = pneg %p75
        $region14: #{tpu_custom_call.1} parent=11 // pred_check_branch
          %146 = sbr.rel (%p144) target = $region16
        $region15: #{tpu_custom_call.1} parent=11 // pred_region
          %s148 = ssub.s32 192, 192
          %149 = vsyncadd [#allocation6], %s148
          %s150 = sshll.u32 [#allocation5], 4
          %s151 = int_to_ptr.vmem [resolvable:$true] %s150
          %156 = dma.hbm_to_vmem [thread:$0]  %s1, 192, %s151, [#allocation6], 64, 64, 4
        $region16: #{tpu_custom_call.1} parent=11 // pred_fallthru
          _
        // Predicated region
        $region17: #{tpu_custom_call.1} parent=11 // pred_check
          %p157 = pneg %p101
        $region18: #{tpu_custom_call.1} parent=11 // pred_check_branch
          %159 = sbr.rel (%p157) target = $region20
        $region19: #{tpu_custom_call.1} parent=11 // pred_region
          %s161 = ssub.s32 3072, 3072
          %162 = vsyncadd [#allocation6], %s161
          %s163 = smul.addr %s26, 64
          %s164 = scalar_lea.hbm %s2, %s163
          %s165 = sshll.u32 [#allocation7], 4
          %s166 = int_to_ptr.vmem [resolvable:$true] %s165
          %171 = dma.hbm_to_vmem [thread:$0]  %s164, 3072, %s166, [#allocation6], 64, 64, 4
        $region20: #{tpu_custom_call.1} parent=11 // pred_fallthru
          _
      $region12: #{tpu_custom_call.1} parent=5 // pred_fallthru
        _
      %p172 = scmp.lt.s32.totalorder %s16, 2
      // Predicated region
      $region21: #{tpu_custom_call.1} parent=5 // pred_check
        %p173 = pneg %p172
      $region22: #{tpu_custom_call.1} parent=5 // pred_check_branch
        %175 = sbr.rel (%p173) target = $region24
      $region23: #{tpu_custom_call.1} parent=5 // pred_region
        // Predicated region
        $region25: #{tpu_custom_call.1} parent=23 // pred_check
          %p176 = pneg %p48
        $region26: #{tpu_custom_call.1} parent=23 // pred_check_branch
          %178 = sbr.rel (%p176) target = $region28
        $region27: #{tpu_custom_call.1} parent=23 // pred_region
          %s179 = sand.u32 %s38, 1
          %s180 = scalar_lea.sflag [#allocation3], %s179
          %s181 = sand.u32 %s38, 1
          %s182 = smul.addr %s181, 8
          %s183 = scalar_lea.vmem [#allocation2], %s182
          %s185 = ssub.s32 128, 128
          %186 = vsyncadd %s180, %s185
          %s187 = smul.addr %s23, 2
          %s188 = smul.addr %s187, 64
          %s189 = scalar_lea.hbm %s0, %s188
          %s190 = sshll.u32 %s183, 4
          %s191 = int_to_ptr.vmem [resolvable:$true] %s190
          %196 = dma.hbm_to_vmem [thread:$0]  %s189, 128, %s191, %s180, 64, 64, 4
        $region28: #{tpu_custom_call.1} parent=23 // pred_fallthru
          _
      $region24: #{tpu_custom_call.1} parent=5 // pred_fallthru
        _
      %p197 = scmp.le.s32.totalorder 1, %s16
      %p198 = scmp.lt.s32.totalorder %s16, 3
      %p199 = pnand %p197, %p198
      %p200 = pneg %p199
      // Predicated region
      $region29: #{tpu_custom_call.1} parent=5 // pred_check
        _
      $region30: #{tpu_custom_call.1} parent=5 // pred_check_branch
        %202 = sbr.rel (%p199) target = $region32
      $region31: #{tpu_custom_call.1} parent=5 // pred_region
        %s203 = ssub.s32 %s16, 1
        %s204 = sand.u32 %s41, 1
        %s205 = scalar_lea.sflag [#allocation3], %s204
        %s206 = sand.u32 %s41, 1
        %s207 = smul.addr %s206, 8
        %s208 = scalar_lea.vmem [#allocation2], %s207
        // Predicated region
        $region33: #{tpu_custom_call.1} parent=31 // pred_check
          %p209 = pneg %p54
        $region34: #{tpu_custom_call.1} parent=31 // pred_check_branch
          %211 = sbr.rel (%p209) target = $region36
        $region35: #{tpu_custom_call.1} parent=31 // pred_region
          %212 = dma.done %s205, 128
        $region36: #{tpu_custom_call.1} parent=31 // pred_fallthru
          _
        // Predicated region
        $region37: #{tpu_custom_call.1} parent=31 // pred_check
          %p213 = pneg %p75
        $region38: #{tpu_custom_call.1} parent=31 // pred_check_branch
          %215 = sbr.rel (%p213) target = $region40
        $region39: #{tpu_custom_call.1} parent=31 // pred_region
          %216 = dma.done [#allocation6], 192
        $region40: #{tpu_custom_call.1} parent=31 // pred_fallthru
          _
        // Predicated region
        $region41: #{tpu_custom_call.1} parent=31 // pred_check
          %p217 = pneg %p101
        $region42: #{tpu_custom_call.1} parent=31 // pred_check_branch
          %219 = sbr.rel (%p217) target = $region44
        $region43: #{tpu_custom_call.1} parent=31 // pred_region
          %220 = dma.done [#allocation6], 3072
        $region44: #{tpu_custom_call.1} parent=31 // pred_fallthru
          _
        %s221 = sand.u32 %s41, 1
        %s222 = scalar_lea.sflag [#allocation3], %s221
        %s223 = sand.u32 %s41, 1
        %s224 = smul.addr %s223, 8
        %s225 = scalar_lea.vmem [#allocation2], %s224
        %p226 = pneg %p54
        %p227 = pneg %p51
        %p228 = pneg %p75
        %p229 = pneg %p72
        %p230 = pneg %p101
        %p231 = pneg %p98
        %p232 = pneg %p129
        %p233 = pneg %p126
        %s234 = sand.u32 %s116, 1
        %s235 = scalar_lea.sflag [#allocation4], %s234
        %s236 = sand.u32 %s116, 1
        %s237 = smul.addr %s236, 8
        %s238 = scalar_lea.vmem [#allocation8], %s237
        %v240 = vld [vmem:[%s208] sm:$0xf]
        %v241 = vld [vmem:[%s208 + $0x4] sm:$0xf]
        %v242 = vld [vmem:[#allocation5] sm:$0xf]
        %v245 = vunpack.c.l.b16 %v240
        %v246 = vunpack.c.l.b16 %v241
        %v247 = vpack.c.b16 %v246, %v245
        %vm249 = vcmask 130048
        %v251 = vsel %vm249, %v242, 0
        %253 = vmatprep.subr.bf16.mxu0 0
        %254 = vmatpush1.bf16.msra.mxu0 %v247
        %255 = vmatprep.subr.bf16.mxu0 0
        %256 = vmatpush1.bf16.msra.mxu0 0
        %257 = vmatprep.subr.bf16.mxu0 0
        %258 = vmatpush1.bf16.msra.mxu0 0
        %259 = vmatprep.subr.bf16.mxu0 0
        %260 = vmatpush1.bf16.msra.mxu0 0
        %261 = vmatprep.subr.bf16.mxu0 0
        %262 = vmatpush1.bf16.msra.mxu0 0
        %263 = vmatprep.subr.bf16.mxu0 0
        %264 = vmatpush1.bf16.msra.mxu0 0
        %265 = vmatprep.subr.bf16.mxu0 0
        %266 = vmatpush1.bf16.msra.mxu0 0
        %267 = vmatprep.subr.bf16.mxu0 0
        %268 = vmatpush1.bf16.msra.mxu0 0
        %269 = vmatprep.subr.bf16.mxu0 0
        %270 = vmatpush1.bf16.msra.mxu0 0
        %271 = vmatprep.subr.bf16.mxu0 0
        %272 = vmatpush1.bf16.msra.mxu0 0
        %273 = vmatprep.subr.bf16.mxu0 0
        %274 = vmatpush1.bf16.msra.mxu0 0
        %275 = vmatprep.subr.bf16.mxu0 0
        %276 = vmatpush1.bf16.msra.mxu0 0
        %277 = vmatprep.subr.bf16.mxu0 0
        %278 = vmatpush1.bf16.msra.mxu0 0
        %279 = vmatprep.subr.bf16.mxu0 0
        %280 = vmatpush1.bf16.msra.mxu0 0
        %281 = vmatprep.subr.bf16.mxu0 0
        %282 = vmatpush1.bf16.msra.mxu0 0
        %283 = vmatprep.subr.bf16.mxu0 0
        %284 = vmatpush1.bf16.msra.mxu0 0
        %285 = vmatprep.mubr.bf16.mxu0 0
        %286 = vmatmul.mubr.bf16.gmra.mrb[0].mxu0 %v251
        %v287 = vpop.f32.mrb[0].mxu0
        %v288 = vadd.f32 0.0, %v287
        %v289 = vpop.f32.mrb[0].mxu0
        %v290 = vpop.f32.mrb[0].mxu0
        %v291 = vpop.f32.mrb[0].mxu0
        %292 = vdwg.mxu0
        %v293 = vpack.c.bf16 %v288, %v288
        %s294 = scalar_lea.vmem [#allocation5], 4
        %v295 = vld [vmem:[%s294] sm:$0xf]
        %v297 = vsel %vm249, %v295, 0
        %299 = vmatprep.subr.bf16.mxu0 0
        %300 = vmatpush1.bf16.msra.mxu0 %v247
        %301 = vmatprep.subr.bf16.mxu0 0
        %302 = vmatpush1.bf16.msra.mxu0 0
        %303 = vmatprep.subr.bf16.mxu0 0
        %304 = vmatpush1.bf16.msra.mxu0 0
        %305 = vmatprep.subr.bf16.mxu0 0
        %306 = vmatpush1.bf16.msra.mxu0 0
        %307 = vmatprep.subr.bf16.mxu0 0
        %308 = vmatpush1.bf16.msra.mxu0 0
        %309 = vmatprep.subr.bf16.mxu0 0
        %310 = vmatpush1.bf16.msra.mxu0 0
        %311 = vmatprep.subr.bf16.mxu0 0
        %312 = vmatpush1.bf16.msra.mxu0 0
        %313 = vmatprep.subr.bf16.mxu0 0
        %314 = vmatpush1.bf16.msra.mxu0 0
        %315 = vmatprep.subr.bf16.mxu0 0
        %316 = vmatpush1.bf16.msra.mxu0 0
        %317 = vmatprep.subr.bf16.mxu0 0
        %318 = vmatpush1.bf16.msra.mxu0 0
        %319 = vmatprep.subr.bf16.mxu0 0
        %320 = vmatpush1.bf16.msra.mxu0 0
        %321 = vmatprep.subr.bf16.mxu0 0
        %322 = vmatpush1.bf16.msra.mxu0 0
        %323 = vmatprep.subr.bf16.mxu0 0
        %324 = vmatpush1.bf16.msra.mxu0 0
        %325 = vmatprep.subr.bf16.mxu0 0
        %326 = vmatpush1.bf16.msra.mxu0 0
        %327 = vmatprep.subr.bf16.mxu0 0
        %328 = vmatpush1.bf16.msra.mxu0 0
        %329 = vmatprep.subr.bf16.mxu0 0
        %330 = vmatpush1.bf16.msra.mxu0 0
        %331 = vmatprep.mubr.bf16.mxu0 0
        %332 = vmatmul.mubr.bf16.gmra.mrb[0].mxu0 %v297
        %v333 = vpop.f32.mrb[0].mxu0
        %v334 = vadd.f32 0.0, %v333
        %v335 = vpop.f32.mrb[0].mxu0
        %v336 = vpop.f32.mrb[0].mxu0
        %v337 = vpop.f32.mrb[0].mxu0
        %338 = vdwg.mxu0
        %v339 = vpack.c.bf16 %v334, %v334
        %s340 = scalar_lea.vmem [#allocation5], 8
        %v341 = vld [vmem:[%s340] sm:$0xf]
        %v343 = vsel %vm249, %v341, 0
        %345 = vmatprep.subr.bf16.mxu0 0
        %346 = vmatpush1.bf16.msra.mxu0 %v247
        %347 = vmatprep.subr.bf16.mxu0 0
        %348 = vmatpush1.bf16.msra.mxu0 0
        %349 = vmatprep.subr.bf16.mxu0 0
        %350 = vmatpush1.bf16.msra.mxu0 0
        %351 = vmatprep.subr.bf16.mxu0 0
        %352 = vmatpush1.bf16.msra.mxu0 0
        %353 = vmatprep.subr.bf16.mxu0 0
        %354 = vmatpush1.bf16.msra.mxu0 0
        %355 = vmatprep.subr.bf16.mxu0 0
        %356 = vmatpush1.bf16.msra.mxu0 0
        %357 = vmatprep.subr.bf16.mxu0 0
        %358 = vmatpush1.bf16.msra.mxu0 0
        %359 = vmatprep.subr.bf16.mxu0 0
        %360 = vmatpush1.bf16.msra.mxu0 0
        %361 = vmatprep.subr.bf16.mxu0 0
        %362 = vmatpush1.bf16.msra.mxu0 0
        %363 = vmatprep.subr.bf16.mxu0 0
        %364 = vmatpush1.bf16.msra.mxu0 0
        %365 = vmatprep.subr.bf16.mxu0 0
        %366 = vmatpush1.bf16.msra.mxu0 0
        %367 = vmatprep.subr.bf16.mxu0 0
        %368 = vmatpush1.bf16.msra.mxu0 0
        %369 = vmatprep.subr.bf16.mxu0 0
        %370 = vmatpush1.bf16.msra.mxu0 0
        %371 = vmatprep.subr.bf16.mxu0 0
        %372 = vmatpush1.bf16.msra.mxu0 0
        %373 = vmatprep.subr.bf16.mxu0 0
        %374 = vmatpush1.bf16.msra.mxu0 0
        %375 = vmatprep.subr.bf16.mxu0 0
        %376 = vmatpush1.bf16.msra.mxu0 0
        %377 = vmatprep.mubr.bf16.mxu0 0
        %378 = vmatmul.mubr.bf16.gmra.mrb[0].mxu0 %v343
        %v379 = vpop.f32.mrb[0].mxu0
        %v380 = vadd.f32 0.0, %v379
        %v381 = vpop.f32.mrb[0].mxu0
        %v382 = vpop.f32.mrb[0].mxu0
        %v383 = vpop.f32.mrb[0].mxu0
        %384 = vdwg.mxu0
        %v385 = vpack.c.bf16 %v380, %v380
        %v386 = vld [vmem:[#allocation7] sm:$0xf]
        %v387 = vld [vmem:[#allocation7 + $0x4] sm:$0xf]
        %v388 = vld [vmem:[#allocation7 + $0x8] sm:$0xf]
        %v389 = vld [vmem:[#allocation7 + $0xc] sm:$0xf]
        %v390 = vld [vmem:[#allocation7 + $0x10] sm:$0xf]
        %v391 = vld [vmem:[#allocation7 + $0x14] sm:$0xf]
        %v392 = vld [vmem:[#allocation7 + $0x18] sm:$0xf]
        %v393 = vld [vmem:[#allocation7 + $0x1c] sm:$0xf]
        %v394 = vld [vmem:[#allocation7 + $0x20] sm:$0xf]
        %v395 = vld [vmem:[#allocation7 + $0x24] sm:$0xf]
        %v396 = vld [vmem:[#allocation7 + $0x28] sm:$0xf]
        %v397 = vld [vmem:[#allocation7 + $0x2c] sm:$0xf]
        %v398 = vld [vmem:[#allocation7 + $0x30] sm:$0xf]
        %v399 = vld [vmem:[#allocation7 + $0x34] sm:$0xf]
        %v400 = vld [vmem:[#allocation7 + $0x38] sm:$0xf]
        %v401 = vld [vmem:[#allocation7 + $0x3c] sm:$0xf]
        %s402 = scalar_lea.vmem [#allocation7], 64
        %v403 = vld [vmem:[%s402] sm:$0xf]
        %v404 = vld [vmem:[%s402 + $0x4] sm:$0xf]
        %v405 = vld [vmem:[%s402 + $0x8] sm:$0xf]
        %v406 = vld [vmem:[%s402 + $0xc] sm:$0xf]
        %v407 = vld [vmem:[%s402 + $0x10] sm:$0xf]
        %v408 = vld [vmem:[%s402 + $0x14] sm:$0xf]
        %v409 = vld [vmem:[%s402 + $0x18] sm:$0xf]
        %v410 = vld [vmem:[%s402 + $0x1c] sm:$0xf]
        %v411 = vld [vmem:[%s402 + $0x20] sm:$0xf]
        %v412 = vld [vmem:[%s402 + $0x24] sm:$0xf]
        %v413 = vld [vmem:[%s402 + $0x28] sm:$0xf]
        %v414 = vld [vmem:[%s402 + $0x2c] sm:$0xf]
        %v415 = vld [vmem:[%s402 + $0x30] sm:$0xf]
        %v416 = vld [vmem:[%s402 + $0x34] sm:$0xf]
        %v417 = vld [vmem:[%s402 + $0x38] sm:$0xf]
        %v418 = vld [vmem:[%s402 + $0x3c] sm:$0xf]
        %v435 = vunpack.c.l.b16 %v403
        %v436 = vunpack.c.l.b16 %v404
        %v437 = vunpack.c.l.b16 %v405
        %v438 = vunpack.c.l.b16 %v406
        %v439 = vunpack.c.l.b16 %v407
        %v440 = vunpack.c.l.b16 %v408
        %v441 = vunpack.c.l.b16 %v409
        %v442 = vunpack.c.l.b16 %v410
        %v443 = vunpack.c.l.b16 %v411
        %v444 = vunpack.c.l.b16 %v412
        %v445 = vunpack.c.l.b16 %v413
        %v446 = vunpack.c.l.b16 %v414
        %v447 = vunpack.c.l.b16 %v415
        %v448 = vunpack.c.l.b16 %v416
        %v449 = vunpack.c.l.b16 %v417
        %v450 = vunpack.c.l.b16 %v418
        %v451 = vpack.c.b16 %v436, %v435
        %v452 = vpack.c.b16 %v438, %v437
        %v453 = vpack.c.b16 %v440, %v439
        %v454 = vpack.c.b16 %v442, %v441
        %v455 = vpack.c.b16 %v444, %v443
        %v456 = vpack.c.b16 %v446, %v445
        %v457 = vpack.c.b16 %v448, %v447
        %v458 = vpack.c.b16 %v450, %v449
        %467 = vmatprep.subr.bf16.mxu0 0
        %468 = vmatpush1.bf16.msra.mxu0 %v451
        %469 = vmatprep.subr.bf16.mxu0 0
        %470 = vmatpush1.bf16.msra.mxu0 %v452
        %471 = vmatprep.subr.bf16.mxu0 0
        %472 = vmatpush1.bf16.msra.mxu0 %v453
        %473 = vmatprep.subr.bf16.mxu0 0
        %474 = vmatpush1.bf16.msra.mxu0 %v454
        %475 = vmatprep.subr.bf16.mxu0 0
        %476 = vmatpush1.bf16.msra.mxu0 %v455
        %477 = vmatprep.subr.bf16.mxu0 0
        %478 = vmatpush1.bf16.msra.mxu0 %v456
        %479 = vmatprep.subr.bf16.mxu0 0
        %480 = vmatpush1.bf16.msra.mxu0 %v457
        %481 = vmatprep.subr.bf16.mxu0 0
        %482 = vmatpush1.bf16.msra.mxu0 %v458
        %483 = vmatprep.subr.bf16.mxu0 0
        %484 = vmatpush1.bf16.msra.mxu0 0
        %485 = vmatprep.subr.bf16.mxu0 0
        %486 = vmatpush1.bf16.msra.mxu0 0
        %487 = vmatprep.subr.bf16.mxu0 0
        %488 = vmatpush1.bf16.msra.mxu0 0
        %489 = vmatprep.subr.bf16.mxu0 0
        %490 = vmatpush1.bf16.msra.mxu0 0
        %491 = vmatprep.subr.bf16.mxu0 0
        %492 = vmatpush1.bf16.msra.mxu0 0
        %493 = vmatprep.subr.bf16.mxu0 0
        %494 = vmatpush1.bf16.msra.mxu0 0
        %495 = vmatprep.subr.bf16.mxu0 0
        %496 = vmatpush1.bf16.msra.mxu0 0
        %497 = vmatprep.subr.bf16.mxu0 0
        %498 = vmatpush1.bf16.msra.mxu0 0
        %499 = vmatprep.mubr.bf16.mxu0 0
        %500 = vmatmul.mubr.bf16.gmra.mrb[0].mxu0 %v339
        %v501 = vpop.f32.mrb[0].mxu0
        %v502 = vadd.f32 0.0, %v501
        %v503 = vpop.f32.mrb[0].mxu0
        %v504 = vpop.f32.mrb[0].mxu0
        %v505 = vpop.f32.mrb[0].mxu0
        %506 = vdwg.mxu0
        %v523 = vunpack.c.l.b16 %v386
        %v524 = vunpack.c.l.b16 %v387
        %v525 = vunpack.c.l.b16 %v388
        %v526 = vunpack.c.l.b16 %v389
        %v527 = vunpack.c.l.b16 %v390
        %v528 = vunpack.c.l.b16 %v391
        %v529 = vunpack.c.l.b16 %v392
        %v530 = vunpack.c.l.b16 %v393
        %v531 = vunpack.c.l.b16 %v394
        %v532 = vunpack.c.l.b16 %v395
        %v533 = vunpack.c.l.b16 %v396
        %v534 = vunpack.c.l.b16 %v397
        %v535 = vunpack.c.l.b16 %v398
        %v536 = vunpack.c.l.b16 %v399
        %v537 = vunpack.c.l.b16 %v400
        %v538 = vunpack.c.l.b16 %v401
        %v539 = vpack.c.b16 %v524, %v523
        %v540 = vpack.c.b16 %v526, %v525
        %v541 = vpack.c.b16 %v528, %v527
        %v542 = vpack.c.b16 %v530, %v529
        %v543 = vpack.c.b16 %v532, %v531
        %v544 = vpack.c.b16 %v534, %v533
        %v545 = vpack.c.b16 %v536, %v535
        %v546 = vpack.c.b16 %v538, %v537
        %555 = vmatprep.subr.bf16.mxu0 0
        %556 = vmatpush1.bf16.msra.mxu0 %v539
        %557 = vmatprep.subr.bf16.mxu0 0
        %558 = vmatpush1.bf16.msra.mxu0 %v540
        %559 = vmatprep.subr.bf16.mxu0 0
        %560 = vmatpush1.bf16.msra.mxu0 %v541
        %561 = vmatprep.subr.bf16.mxu0 0
        %562 = vmatpush1.bf16.msra.mxu0 %v542
        %563 = vmatprep.subr.bf16.mxu0 0
        %564 = vmatpush1.bf16.msra.mxu0 %v543
        %565 = vmatprep.subr.bf16.mxu0 0
        %566 = vmatpush1.bf16.msra.mxu0 %v544
        %567 = vmatprep.subr.bf16.mxu0 0
        %568 = vmatpush1.bf16.msra.mxu0 %v545
        %569 = vmatprep.subr.bf16.mxu0 0
        %570 = vmatpush1.bf16.msra.mxu0 %v546
        %571 = vmatprep.subr.bf16.mxu0 0
        %572 = vmatpush1.bf16.msra.mxu0 0
        %573 = vmatprep.subr.bf16.mxu0 0
        %574 = vmatpush1.bf16.msra.mxu0 0
        %575 = vmatprep.subr.bf16.mxu0 0
        %576 = vmatpush1.bf16.msra.mxu0 0
        %577 = vmatprep.subr.bf16.mxu0 0
        %578 = vmatpush1.bf16.msra.mxu0 0
        %579 = vmatprep.subr.bf16.mxu0 0
        %580 = vmatpush1.bf16.msra.mxu0 0
        %581 = vmatprep.subr.bf16.mxu0 0
        %582 = vmatpush1.bf16.msra.mxu0 0
        %583 = vmatprep.subr.bf16.mxu0 0
        %584 = vmatpush1.bf16.msra.mxu0 0
        %585 = vmatprep.subr.bf16.mxu0 0
        %586 = vmatpush1.bf16.msra.mxu0 0
        %587 = vmatprep.mubr.bf16.mxu0 0
        %588 = vmatmul.mubr.bf16.gmra.mrb[0].mxu0 %v293
        %v589 = vpop.f32.mrb[0].mxu0
        %v590 = vadd.f32 %v502, %v589
        %v591 = vpop.f32.mrb[0].mxu0
        %v592 = vpop.f32.mrb[0].mxu0
        %v593 = vpop.f32.mrb[0].mxu0
        %594 = vdwg.mxu0
        %s595 = scalar_lea.vmem [#allocation7], 128
        %v596 = vld [vmem:[%s595] sm:$0xf]
        %v597 = vld [vmem:[%s595 + $0x4] sm:$0xf]
        %v598 = vld [vmem:[%s595 + $0x8] sm:$0xf]
        %v599 = vld [vmem:[%s595 + $0xc] sm:$0xf]
        %v600 = vld [vmem:[%s595 + $0x10] sm:$0xf]
        %v601 = vld [vmem:[%s595 + $0x14] sm:$0xf]
        %v602 = vld [vmem:[%s595 + $0x18] sm:$0xf]
        %v603 = vld [vmem:[%s595 + $0x1c] sm:$0xf]
        %v604 = vld [vmem:[%s595 + $0x20] sm:$0xf]
        %v605 = vld [vmem:[%s595 + $0x24] sm:$0xf]
        %v606 = vld [vmem:[%s595 + $0x28] sm:$0xf]
        %v607 = vld [vmem:[%s595 + $0x2c] sm:$0xf]
        %v608 = vld [vmem:[%s595 + $0x30] sm:$0xf]
        %v609 = vld [vmem:[%s595 + $0x34] sm:$0xf]
        %v610 = vld [vmem:[%s595 + $0x38] sm:$0xf]
        %v611 = vld [vmem:[%s595 + $0x3c] sm:$0xf]
        %v628 = vunpack.c.l.b16 %v596
        %v629 = vunpack.c.l.b16 %v597
        %v630 = vunpack.c.l.b16 %v598
        %v631 = vunpack.c.l.b16 %v599
        %v632 = vunpack.c.l.b16 %v600
        %v633 = vunpack.c.l.b16 %v601
        %v634 = vunpack.c.l.b16 %v602
        %v635 = vunpack.c.l.b16 %v603
        %v636 = vunpack.c.l.b16 %v604
        %v637 = vunpack.c.l.b16 %v605
        %v638 = vunpack.c.l.b16 %v606
        %v639 = vunpack.c.l.b16 %v607
        %v640 = vunpack.c.l.b16 %v608
        %v641 = vunpack.c.l.b16 %v609
        %v642 = vunpack.c.l.b16 %v610
        %v643 = vunpack.c.l.b16 %v611
        %v644 = vpack.c.b16 %v629, %v628
        %v645 = vpack.c.b16 %v631, %v630
        %v646 = vpack.c.b16 %v633, %v632
        %v647 = vpack.c.b16 %v635, %v634
        %v648 = vpack.c.b16 %v637, %v636
        %v649 = vpack.c.b16 %v639, %v638
        %v650 = vpack.c.b16 %v641, %v640
        %v651 = vpack.c.b16 %v643, %v642
        %660 = vmatprep.subr.bf16.mxu0 0
        %661 = vmatpush1.bf16.msra.mxu0 %v644
        %662 = vmatprep.subr.bf16.mxu0 0
        %663 = vmatpush1.bf16.msra.mxu0 %v645
        %664 = vmatprep.subr.bf16.mxu0 0
        %665 = vmatpush1.bf16.msra.mxu0 %v646
        %666 = vmatprep.subr.bf16.mxu0 0
        %667 = vmatpush1.bf16.msra.mxu0 %v647
        %668 = vmatprep.subr.bf16.mxu0 0
        %669 = vmatpush1.bf16.msra.mxu0 %v648
        %670 = vmatprep.subr.bf16.mxu0 0
        %671 = vmatpush1.bf16.msra.mxu0 %v649
        %672 = vmatprep.subr.bf16.mxu0 0
        %673 = vmatpush1.bf16.msra.mxu0 %v650
        %674 = vmatprep.subr.bf16.mxu0 0
        %675 = vmatpush1.bf16.msra.mxu0 %v651
        %676 = vmatprep.subr.bf16.mxu0 0
        %677 = vmatpush1.bf16.msra.mxu0 0
        %678 = vmatprep.subr.bf16.mxu0 0
        %679 = vmatpush1.bf16.msra.mxu0 0
        %680 = vmatprep.subr.bf16.mxu0 0
        %681 = vmatpush1.bf16.msra.mxu0 0
        %682 = vmatprep.subr.bf16.mxu0 0
        %683 = vmatpush1.bf16.msra.mxu0 0
        %684 = vmatprep.subr.bf16.mxu0 0
        %685 = vmatpush1.bf16.msra.mxu0 0
        %686 = vmatprep.subr.bf16.mxu0 0
        %687 = vmatpush1.bf16.msra.mxu0 0
        %688 = vmatprep.subr.bf16.mxu0 0
        %689 = vmatpush1.bf16.msra.mxu0 0
        %690 = vmatprep.subr.bf16.mxu0 0
        %691 = vmatpush1.bf16.msra.mxu0 0
        %692 = vmatprep.mubr.bf16.mxu0 0
        %693 = vmatmul.mubr.bf16.gmra.mrb[0].mxu0 %v385
        %v694 = vpop.f32.mrb[0].mxu0
        %v695 = vadd.f32 0.0, %v694
        %v696 = vpop.f32.mrb[0].mxu0
        %v697 = vpop.f32.mrb[0].mxu0
        %v698 = vpop.f32.mrb[0].mxu0
        %699 = vdwg.mxu0
        %v700 = vadd.f32 %v590, %v695
        %701 = vst [vmem:[%s238] sm:$0xff] %v700
        %s702 = sand.u32 %s116, 1
        %s703 = scalar_lea.sflag [#allocation4], %s702
        %s704 = sand.u32 %s116, 1
        %s705 = smul.addr %s704, 8
        %s706 = scalar_lea.vmem [#allocation8], %s705
        // Predicated region
        $region45: #{tpu_custom_call.1} parent=31 // pred_check
          %p707 = pneg %p126
        $region46: #{tpu_custom_call.1} parent=31 // pred_check_branch
          %709 = sbr.rel (%p707) target = $region48
        $region47: #{tpu_custom_call.1} parent=31 // pred_region
          %s711 = ssub.s32 128, 128
          %712 = vsyncadd %s703, %s711
          %s713 = sadd.s32 %s26, %s25
          %s714 = smul.addr %s713, 128
          %s715 = scalar_lea.hbm %s3, %s714
          %s717 = sshll.u32 %s706, 4
          %s718 = int_to_ptr.vmem [resolvable:$true] %s717
          %720 = dma.vmem_to_hbm [thread:$0]  %s718, 128, %s715, %s703
        $region48: #{tpu_custom_call.1} parent=31 // pred_fallthru
          _
      $region32: #{tpu_custom_call.1} parent=5 // pred_fallthru
        _
      %p721 = scmp.le.s32.totalorder 2, %s16
      // Predicated region
      $region49: #{tpu_custom_call.1} parent=5 // pred_check
        %p722 = pneg %p721
      $region50: #{tpu_custom_call.1} parent=5 // pred_check_branch
        %724 = sbr.rel (%p722) target = $region52
      $region51: #{tpu_custom_call.1} parent=5 // pred_region
        %s725 = ssub.s32 %s16, 2
        // Predicated region
        $region53: #{tpu_custom_call.1} parent=51 // pred_check
          %p726 = pneg %p132
        $region54: #{tpu_custom_call.1} parent=51 // pred_check_branch
          %728 = sbr.rel (%p726) target = $region56
        $region55: #{tpu_custom_call.1} parent=51 // pred_region
          %s729 = sand.u32 %s117, 1
          %s730 = scalar_lea.sflag [#allocation4], %s729
          %s731 = sand.u32 %s117, 1
          %s732 = smul.addr %s731, 8
          %s733 = scalar_lea.vmem [#allocation8], %s732
          %734 = dma.done %s730, 128
        $region56: #{tpu_custom_call.1} parent=51 // pred_fallthru
          _
      $region52: #{tpu_custom_call.1} parent=5 // pred_fallthru
        _
    $region6: #{tpu_custom_call.1} parent=1 // loop_footer
      %s20 = sadd.s32 1, %s16
    $region7: #{tpu_custom_call.1} parent=1 // loop_footer_branch
      %15 = sbr.rel target = $region3
    $region8: #{tpu_custom_call.1} parent=1 // loop_exit
      _
    %735 = vsyncpa [#allocation3], 1
    %s736 = scalar_lea.sflag [#allocation3], 1
    %737 = vsyncpa %s736, 1
    %738 = vsyncpa [#allocation6], 1
    %739 = vsyncpa [#allocation4], 1
    %s740 = scalar_lea.sflag [#allocation4], 1
    %741 = vsyncpa %s740, 1

</llo_original>
